<compile_context>
chip_gen: v6e
topology: v6e:2x2x1
jax: 0.10.0
libtpu: 0.0.40
codegen_flags: <defaults>
</compile_context>

<pallas_src>
import jax
import jax.numpy as jnp
from jax.experimental import pallas as pl
from jax.experimental.pallas import tpu as pltpu


def linear_kernel(x_ref, w_ref, b_ref, o_ref):
    # x_ref: (B, K), w_ref: (K, N), b_ref: (1, N), o_ref: (B, N)
    # Everything is fully resident in VMEM; one MXU matmul + bias add epilogue.
    acc = jnp.dot(x_ref[...], w_ref[...], preferred_element_type=jnp.float32)
    o_ref[...] = (acc + b_ref[...]).astype(o_ref.dtype)


def linear_pallas(x_flat, w, b2d):
    B, K = x_flat.shape
    Kw, N = w.shape
    assert K == Kw, (K, Kw)

    cost = pl.CostEstimate(
        flops=2 * B * K * N,
        transcendentals=0,
        bytes_accessed=4 * (B * K + K * N + B * N),
    )

    # No grid: single invocation, full arrays pinned in VMEM
    # (x: 6 KiB, W: 1.53 MiB, b: 2 KiB, out: 4 KiB at B=2).
    vmem = pl.BlockSpec(memory_space=pltpu.MemorySpace.VMEM)

    return pl.pallas_call(
        linear_kernel,
        out_shape=jax.ShapeDtypeStruct((B, N), x_flat.dtype),
        in_specs=[vmem, vmem, vmem],
        out_specs=vmem,
        cost_estimate=cost,
    )(x_flat, w, b2d)


def prepare_params(w, b):
    """One-time parameter prep: bias -> (1, N) for clean 2-D VMEM layout."""
    _, N = w.shape
    return w, b.reshape(1, N)


def neural_network_forward(x, w, b2d):
    # nn.Flatten(): keep batch dim, flatten C*H*W = 784 (row-major, matches NCHW).
    B = x.shape[0]
    x_flat = x.reshape(B, -1)
    return linear_pallas(x_flat, w, b2d)


if __name__ == "__main__":
    key = jax.random.PRNGKey(0)
    k_x, k_w, k_b = jax.random.split(key, 3)

    B, C, H, W = 2, 1, 28, 28
    IN, OUT = 28 * 28, 512

    # Deterministic parameter init mimicking nn.Linear default:
    # uniform(-1/sqrt(in_features), 1/sqrt(in_features))
    bound = 1.0 / (IN ** 0.5)
    w = jax.random.uniform(k_w, (IN, OUT), jnp.float32, -bound, bound)  # (K, N) = weight.T
    b = jax.random.uniform(k_b, (OUT,), jnp.float32, -bound, bound)

    x = jax.random.normal(k_x, (B, C, H, W), jnp.float32)

    w_p, b2d = prepare_params(w, b)

    out = neural_network_forward(x, w_p, b2d)
    out = jax.block_until_ready(out)

    assert out.shape == (B, OUT), out.shape
    assert out.dtype == jnp.float32

    # sanity check vs plain JAX reference
    ref = x.reshape(B, -1) @ w + b
    assert jnp.allclose(out, ref, atol=1e-4, rtol=1e-4)

    print("KERNEL_OK")
</pallas_src>

<mosaic_0001>
module attributes {stable_mosaic.version = 11 : i64} {
  func.func @linear_kernel(%arg0: memref<2x784xf32, #tpu.memory_space<vmem>>, %arg1: memref<784x512xf32, #tpu.memory_space<vmem>>, %arg2: memref<1x512xf32, #tpu.memory_space<vmem>>, %arg3: memref<2x512xf32, #tpu.memory_space<vmem>>) attributes {dimension_semantics = [], scalar_prefetch = 0 : i64, scratch_operands = 0 : i64, tpu.core_type = #tpu.core_type<tc>} {
    %c0 = arith.constant 0 : index
    %c0_0 = arith.constant 0 : index
    %0 = vector.load %arg0[%c0, %c0_0] : memref<2x784xf32, #tpu.memory_space<vmem>>, vector<2x784xf32>
    %c0_1 = arith.constant 0 : index
    %c0_2 = arith.constant 0 : index
    %1 = vector.load %arg1[%c0_1, %c0_2] : memref<784x512xf32, #tpu.memory_space<vmem>>, vector<784x512xf32>
    %cst = arith.constant dense<0.000000e+00> : vector<2x512xf32>
    %2 = tpu.matmul %0, %1, %cst {dimension_numbers = #tpu.dot_dimension_numbers<[1], [0], [0], [1], [0, 0, 1, 1], [], []>} : vector<2x784xf32>, vector<784x512xf32>, vector<2x512xf32> -> vector<2x512xf32>
    %c0_3 = arith.constant 0 : index
    %c0_4 = arith.constant 0 : index
    %3 = vector.load %arg2[%c0_3, %c0_4] : memref<1x512xf32, #tpu.memory_space<vmem>>, vector<1x512xf32>
    %4 = vector.broadcast %3 : vector<1x512xf32> to vector<2x512xf32>
    %5 = arith.addf %2, %4 : vector<2x512xf32>
    %c0_5 = arith.constant 0 : index
    %c0_6 = arith.constant 0 : index
    %6 = vector.load %arg3[%c0_5, %c0_6] : memref<2x512xf32, #tpu.memory_space<vmem>>, vector<2x512xf32>
    tpu.vector_store %arg3[%c0_5, %c0_6], %5 {strides = array<i32>} : memref<2x512xf32, #tpu.memory_space<vmem>>, vector<2x512xf32>,
    return
  }
}

</mosaic_0001>

<llo_original>
// kernel: tpu_custom_call.1
$region0: #{tpu_custom_call.1}
  #allocation0 [shape = 'u32[]', space=smem, size = 0x4, offset = 0x4, fixed_abs, tag = 'smem constant byte address 0x4 - core index']
  #allocation1 [shape = 'u32[144,128]{1,0:T(1,128)}', space=vmem, size = 0x12000, scoped, tag = 'internal scratch']
  %s0 = inlined_call_operand.hbm [shape: f32[2,784], index: 0, kind: input, shape index: {}]
  %s1 = inlined_call_operand.hbm [shape: f32[784,512], index: 1, kind: input, shape index: {}]
  %s2 = inlined_call_operand.hbm [shape: f32[1,512], index: 2, kind: input, shape index: {}]
  %s3 = inlined_call_operand.hbm [shape: f32[2,512], index: 3, kind: output, shape index: {}]
  %s4 = sld [smem:[#allocation0]]
  $region34: #{tpu_custom_call.1} parent=0
    _
  %s6 = ssub.s32 1, %s4
  %s7 = scalar_select 0, %s6, %s4
  $region1: #{tpu_custom_call.1} parent=0
    #allocation2 [shape = 'u8[7168]{0}', space=vmem, size = 0x1c00, scoped, tag = 'input window, operand 0, single buffered']
    #allocation3 [shape = 's32[1]{0}', space=sflag, size = 0x4, scoped, tag = 'scoped memory for tpu_custom_call.1']
    #allocation4 [shape = 's32[1]{0}', space=sflag, size = 0x4, scoped, tag = 'scoped memory for tpu_custom_call.1']
    #allocation5 [shape = 'u8[1605632]{0}', space=vmem, size = 0x188000, scoped, tag = 'input window, operand 1, single buffered']
    #allocation6 [shape = 's32[1]{0}', space=sflag, size = 0x4, scoped, tag = 'scoped memory for tpu_custom_call.1']
    #allocation7 [shape = 'u8[2048]{0}', space=vmem, size = 0x800, scoped, tag = 'input window, operand 2, single buffered']
    #allocation8 [shape = 'u8[4096]{0}', space=vmem, size = 0x1000, scoped, tag = 'output window, operand 0, single buffered']
    %8 = vsyncpa [#allocation3], 0
    %9 = vsyncpa [#allocation6], 0
    %10 = vsyncpa [#allocation4], 0
    // Predicated region
    $region2: #{tpu_custom_call.1} parent=1 // pred_check
      _
    $region3: #{tpu_custom_call.1} parent=1 // pred_check_branch
      %12 = sbr.rel (0) target = $region5
    $region4: #{tpu_custom_call.1} parent=1 // pred_region
      %s14 = ssub.s32 224, 224
      %15 = vsyncadd [#allocation3], %s14
      %s17 = sshll.u32 [#allocation2], 4
      %s18 = int_to_ptr.vmem [resolvable:$true] %s17
      %20 = dma.hbm_to_vmem [thread:$0]  %s0, 224, %s18, [#allocation3]
    $region5: #{tpu_custom_call.1} parent=1 // pred_fallthru
      _
    // Predicated region
    $region6: #{tpu_custom_call.1} parent=1 // pred_check
      _
    $region7: #{tpu_custom_call.1} parent=1 // pred_check_branch
      %22 = sbr.rel (0) target = $region9
    $region8: #{tpu_custom_call.1} parent=1 // pred_region
      %s24 = ssub.s32 50176, 50176
      %25 = vsyncadd [#allocation6], %s24
      %s26 = sshll.u32 [#allocation5], 4
      %s27 = int_to_ptr.vmem [resolvable:$true] %s26
      %32 = dma.hbm_to_vmem [thread:$0]  %s1, 50176, %s27, [#allocation6], 512, 512, 32
    $region9: #{tpu_custom_call.1} parent=1 // pred_fallthru
      _
    // Predicated region
    $region10: #{tpu_custom_call.1} parent=1 // pred_check
      _
    $region11: #{tpu_custom_call.1} parent=1 // pred_check_branch
      %34 = sbr.rel (0) target = $region13
    $region12: #{tpu_custom_call.1} parent=1 // pred_region
      %s36 = ssub.s32 64, 64
      %37 = vsyncadd [#allocation6], %s36
      %s39 = sshll.u32 [#allocation7], 4
      %s40 = int_to_ptr.vmem [resolvable:$true] %s39
      %42 = dma.hbm_to_vmem [thread:$0]  %s2, 64, %s40, [#allocation6]
    $region13: #{tpu_custom_call.1} parent=1 // pred_fallthru
      _
    // Predicated region
    $region14: #{tpu_custom_call.1} parent=1 // pred_check
      _
    $region15: #{tpu_custom_call.1} parent=1 // pred_check_branch
      %44 = sbr.rel (0) target = $region17
    $region16: #{tpu_custom_call.1} parent=1 // pred_region
      %45 = dma.done [#allocation3], 224
    $region17: #{tpu_custom_call.1} parent=1 // pred_fallthru
      _
    // Predicated region
    $region18: #{tpu_custom_call.1} parent=1 // pred_check
      _
    $region19: #{tpu_custom_call.1} parent=1 // pred_check_branch
      %47 = sbr.rel (0) target = $region21
    $region20: #{tpu_custom_call.1} parent=1 // pred_region
      %48 = dma.done [#allocation6], 50176
    $region21: #{tpu_custom_call.1} parent=1 // pred_fallthru
      _
    // Predicated region
    $region22: #{tpu_custom_call.1} parent=1 // pred_check
      _
    $region23: #{tpu_custom_call.1} parent=1 // pred_check_branch
      %50 = sbr.rel (0) target = $region25
    $region24: #{tpu_custom_call.1} parent=1 // pred_region
      %51 = dma.done [#allocation6], 64
    $region25: #{tpu_custom_call.1} parent=1 // pred_fallthru
      _
    %v52 = vld [vmem:[#allocation2] sm:$0xff]
    %v53 = vld [vmem:[#allocation2 + $0x8] sm:$0x3f]
    %v54 = vld [vmem:[#allocation5] sm:$0xff]
    %v55 = vld [vmem:[#allocation5 + $0x8] sm:$0xff]
    %v56 = vld [vmem:[#allocation5 + $0x10] sm:$0xff]
    %v57 = vld [vmem:[#allocation5 + $0x18] sm:$0xff]
    %v58 = vld [vmem:[#allocation5 + $0x20] sm:$0xff]
    %v59 = vld [vmem:[#allocation5 + $0x28] sm:$0xff]
    %v60 = vld [vmem:[#allocation5 + $0x30] sm:$0xff]
    %v61 = vld [vmem:[#allocation5 + $0x38] sm:$0xff]
    %v62 = vld [vmem:[#allocation5 + $0x40] sm:$0xff]
    %v63 = vld [vmem:[#allocation5 + $0x48] sm:$0xff]
    %v64 = vld [vmem:[#allocation5 + $0x50] sm:$0xff]
    %v65 = vld [vmem:[#allocation5 + $0x58] sm:$0xff]
    %v66 = vld [vmem:[#allocation5 + $0x60] sm:$0xff]
    %v67 = vld [vmem:[#allocation5 + $0x68] sm:$0xff]
    %v68 = vld [vmem:[#allocation5 + $0x70] sm:$0xff]
    %v69 = vld [vmem:[#allocation5 + $0x78] sm:$0xff]
    %v70 = vld [vmem:[#allocation5 + $0x80] sm:$0xff]
    %v71 = vld [vmem:[#allocation5 + $0x88] sm:$0xff]
    %v72 = vld [vmem:[#allocation5 + $0x90] sm:$0xff]
    %v73 = vld [vmem:[#allocation5 + $0x98] sm:$0xff]
    %v74 = vld [vmem:[#allocation5 + $0xa0] sm:$0xff]
    %v75 = vld [vmem:[#allocation5 + $0xa8] sm:$0xff]
    %v76 = vld [vmem:[#allocation5 + $0xb0] sm:$0xff]
    %v77 = vld [vmem:[#allocation5 + $0xb8] sm:$0xff]
    %v78 = vld [vmem:[#allocation5 + $0xc0] sm:$0xff]
    %v79 = vld [vmem:[#allocation5 + $0xc8] sm:$0xff]
    %v80 = vld [vmem:[#allocation5 + $0xd0] sm:$0xff]
    %v81 = vld [vmem:[#allocation5 + $0xd8] sm:$0xff]
    %v82 = vld [vmem:[#allocation5 + $0xe0] sm:$0xff]
    %v83 = vld [vmem:[#allocation5 + $0xe8] sm:$0xff]
    %v84 = vld [vmem:[#allocation5 + $0xf0] sm:$0xff]
    %v85 = vld [vmem:[#allocation5 + $0xf8] sm:$0xff]
    %v86 = vld [vmem:[#allocation5 + $0x100] sm:$0xff]
    %v87 = vld [vmem:[#allocation5 + $0x108] sm:$0xff]
    %v88 = vld [vmem:[#allocation5 + $0x110] sm:$0xff]
    %v89 = vld [vmem:[#allocation5 + $0x118] sm:$0xff]
    %v90 = vld [vmem:[#allocation5 + $0x120] sm:$0xff]
    %v91 = vld [vmem:[#allocation5 + $0x128] sm:$0xff]
    %v92 = vld [vmem:[#allocation5 + $0x130] sm:$0xff]
    %v93 = vld [vmem:[#allocation5 + $0x138] sm:$0xff]
    %v94 = vld [vmem:[#allocation5 + $0x140] sm:$0xff]
    %v95 = vld [vmem:[#allocation5 + $0x148] sm:$0xff]
    %v96 = vld [vmem:[#allocation5 + $0x150] sm:$0xff]
    %v97 = vld [vmem:[#allocation5 + $0x158] sm:$0xff]
    %v98 = vld [vmem:[#allocation5 + $0x160] sm:$0xff]
    %v99 = vld [vmem:[#allocation5 + $0x168] sm:$0xff]
    %v100 = vld [vmem:[#allocation5 + $0x170] sm:$0xff]
    %v101 = vld [vmem:[#allocation5 + $0x178] sm:$0xff]
    %v102 = vld [vmem:[#allocation5 + $0x180] sm:$0xff]
    %v103 = vld [vmem:[#allocation5 + $0x188] sm:$0xff]
    %v104 = vld [vmem:[#allocation5 + $0x190] sm:$0xff]
    %v105 = vld [vmem:[#allocation5 + $0x198] sm:$0xff]
    %v106 = vld [vmem:[#allocation5 + $0x1a0] sm:$0xff]
    %v107 = vld [vmem:[#allocation5 + $0x1a8] sm:$0xff]
    %v108 = vld [vmem:[#allocation5 + $0x1b0] sm:$0xff]
    %v109 = vld [vmem:[#allocation5 + $0x1b8] sm:$0xff]
    %v110 = vld [vmem:[#allocation5 + $0x1c0] sm:$0xff]
    %v111 = vld [vmem:[#allocation5 + $0x1c8] sm:$0xff]
    %v112 = vld [vmem:[#allocation5 + $0x1d0] sm:$0xff]
    %v113 = vld [vmem:[#allocation5 + $0x1d8] sm:$0xff]
    %v114 = vld [vmem:[#allocation5 + $0x1e0] sm:$0xff]
    %v115 = vld [vmem:[#allocation5 + $0x1e8] sm:$0xff]
    %v116 = vld [vmem:[#allocation5 + $0x1f0] sm:$0xff]
    %v117 = vld [vmem:[#allocation5 + $0x1f8] sm:$0xff]
    %v118 = vld [vmem:[#allocation5 + $0x200] sm:$0xff]
    %v119 = vld [vmem:[#allocation5 + $0x208] sm:$0xff]
    %v120 = vld [vmem:[#allocation5 + $0x210] sm:$0xff]
    %v121 = vld [vmem:[#allocation5 + $0x218] sm:$0xff]
    %v122 = vld [vmem:[#allocation5 + $0x220] sm:$0xff]
    %v123 = vld [vmem:[#allocation5 + $0x228] sm:$0xff]
    %v124 = vld [vmem:[#allocation5 + $0x230] sm:$0xff]
    %v125 = vld [vmem:[#allocation5 + $0x238] sm:$0xff]
    %v126 = vld [vmem:[#allocation5 + $0x240] sm:$0xff]
    %v127 = vld [vmem:[#allocation5 + $0x248] sm:$0xff]
    %v128 = vld [vmem:[#allocation5 + $0x250] sm:$0xff]
    %v129 = vld [vmem:[#allocation5 + $0x258] sm:$0xff]
    %v130 = vld [vmem:[#allocation5 + $0x260] sm:$0xff]
    %v131 = vld [vmem:[#allocation5 + $0x268] sm:$0xff]
    %v132 = vld [vmem:[#allocation5 + $0x270] sm:$0xff]
    %v133 = vld [vmem:[#allocation5 + $0x278] sm:$0xff]
    %v134 = vld [vmem:[#allocation5 + $0x280] sm:$0xff]
    %v135 = vld [vmem:[#allocation5 + $0x288] sm:$0xff]
    %v136 = vld [vmem:[#allocation5 + $0x290] sm:$0xff]
    %v137 = vld [vmem:[#allocation5 + $0x298] sm:$0xff]
    %v138 = vld [vmem:[#allocation5 + $0x2a0] sm:$0xff]
    %v139 = vld [vmem:[#allocation5 + $0x2a8] sm:$0xff]
    %v140 = vld [vmem:[#allocation5 + $0x2b0] sm:$0xff]
    %v141 = vld [vmem:[#allocation5 + $0x2b8] sm:$0xff]
    %v142 = vld [vmem:[#allocation5 + $0x2c0] sm:$0xff]
    %v143 = vld [vmem:[#allocation5 + $0x2c8] sm:$0xff]
    %v144 = vld [vmem:[#allocation5 + $0x2d0] sm:$0xff]
    %v145 = vld [vmem:[#allocation5 + $0x2d8] sm:$0xff]
    %v146 = vld [vmem:[#allocation5 + $0x2e0] sm:$0xff]
    %v147 = vld [vmem:[#allocation5 + $0x2e8] sm:$0xff]
    %v148 = vld [vmem:[#allocation5 + $0x2f0] sm:$0xff]
    %v149 = vld [vmem:[#allocation5 + $0x2f8] sm:$0xff]
    %v150 = vld [vmem:[#allocation5 + $0x300] sm:$0xff]
    %v151 = vld [vmem:[#allocation5 + $0x308] sm:$0xff]
    %v152 = vld [vmem:[#allocation5 + $0x310] sm:$0xff]
    %v153 = vld [vmem:[#allocation5 + $0x318] sm:$0xff]
    %v154 = vld [vmem:[#allocation5 + $0x320] sm:$0xff]
    %v155 = vld [vmem:[#allocation5 + $0x328] sm:$0xff]
    %v156 = vld [vmem:[#allocation5 + $0x330] sm:$0xff]
    %v157 = vld [vmem:[#allocation5 + $0x338] sm:$0xff]
    %v158 = vld [vmem:[#allocation5 + $0x340] sm:$0xff]
    %v159 = vld [vmem:[#allocation5 + $0x348] sm:$0xff]
    %v160 = vld [vmem:[#allocation5 + $0x350] sm:$0xff]
    %v161 = vld [vmem:[#allocation5 + $0x358] sm:$0xff]
    %v162 = vld [vmem:[#allocation5 + $0x360] sm:$0xff]
    %v163 = vld [vmem:[#allocation5 + $0x368] sm:$0xff]
    %v164 = vld [vmem:[#allocation5 + $0x370] sm:$0xff]
    %v165 = vld [vmem:[#allocation5 + $0x378] sm:$0xff]
    %v166 = vld [vmem:[#allocation5 + $0x380] sm:$0xff]
    %v167 = vld [vmem:[#allocation5 + $0x388] sm:$0xff]
    %v168 = vld [vmem:[#allocation5 + $0x390] sm:$0xff]
    %v169 = vld [vmem:[#allocation5 + $0x398] sm:$0xff]
    %v170 = vld [vmem:[#allocation5 + $0x3a0] sm:$0xff]
    %v171 = vld [vmem:[#allocation5 + $0x3a8] sm:$0xff]
    %v172 = vld [vmem:[#allocation5 + $0x3b0] sm:$0xff]
    %v173 = vld [vmem:[#allocation5 + $0x3b8] sm:$0xff]
    %v174 = vld [vmem:[#allocation5 + $0x3c0] sm:$0xff]
    %v175 = vld [vmem:[#allocation5 + $0x3c8] sm:$0xff]
    %v176 = vld [vmem:[#allocation5 + $0x3d0] sm:$0xff]
    %v177 = vld [vmem:[#allocation5 + $0x3d8] sm:$0xff]
    %v178 = vld [vmem:[#allocation5 + $0x3e0] sm:$0xff]
    %v179 = vld [vmem:[#allocation5 + $0x3e8] sm:$0xff]
    %v180 = vld [vmem:[#allocation5 + $0x3f0] sm:$0xff]
    %v181 = vld [vmem:[#allocation5 + $0x3f8] sm:$0xff]
    %v182 = vld [vmem:[#allocation5 + $0x400] sm:$0xff]
    %v183 = vld [vmem:[#allocation5 + $0x408] sm:$0xff]
    %v184 = vld [vmem:[#allocation5 + $0x410] sm:$0xff]
    %v185 = vld [vmem:[#allocation5 + $0x418] sm:$0xff]
    %v186 = vld [vmem:[#allocation5 + $0x420] sm:$0xff]
    %v187 = vld [vmem:[#allocation5 + $0x428] sm:$0xff]
    %v188 = vld [vmem:[#allocation5 + $0x430] sm:$0xff]
    %v189 = vld [vmem:[#allocation5 + $0x438] sm:$0xff]
    %v190 = vld [vmem:[#allocation5 + $0x440] sm:$0xff]
    %v191 = vld [vmem:[#allocation5 + $0x448] sm:$0xff]
    %v192 = vld [vmem:[#allocation5 + $0x450] sm:$0xff]
    %v193 = vld [vmem:[#allocation5 + $0x458] sm:$0xff]
    %v194 = vld [vmem:[#allocation5 + $0x460] sm:$0xff]
    %v195 = vld [vmem:[#allocation5 + $0x468] sm:$0xff]
    %v196 = vld [vmem:[#allocation5 + $0x470] sm:$0xff]
    %v197 = vld [vmem:[#allocation5 + $0x478] sm:$0xff]
    %v198 = vld [vmem:[#allocation5 + $0x480] sm:$0xff]
    %v199 = vld [vmem:[#allocation5 + $0x488] sm:$0xff]
    %v200 = vld [vmem:[#allocation5 + $0x490] sm:$0xff]
    %v201 = vld [vmem:[#allocation5 + $0x498] sm:$0xff]
    %v202 = vld [vmem:[#allocation5 + $0x4a0] sm:$0xff]
    %v203 = vld [vmem:[#allocation5 + $0x4a8] sm:$0xff]
    %v204 = vld [vmem:[#allocation5 + $0x4b0] sm:$0xff]
    %v205 = vld [vmem:[#allocation5 + $0x4b8] sm:$0xff]
    %v206 = vld [vmem:[#allocation5 + $0x4c0] sm:$0xff]
    %v207 = vld [vmem:[#allocation5 + $0x4c8] sm:$0xff]
    %v208 = vld [vmem:[#allocation5 + $0x4d0] sm:$0xff]
    %v209 = vld [vmem:[#allocation5 + $0x4d8] sm:$0xff]
    %v210 = vld [vmem:[#allocation5 + $0x4e0] sm:$0xff]
    %v211 = vld [vmem:[#allocation5 + $0x4e8] sm:$0xff]
    %v212 = vld [vmem:[#allocation5 + $0x4f0] sm:$0xff]
    %v213 = vld [vmem:[#allocation5 + $0x4f8] sm:$0xff]
    %v214 = vld [vmem:[#allocation5 + $0x500] sm:$0xff]
    %v215 = vld [vmem:[#allocation5 + $0x508] sm:$0xff]
    %v216 = vld [vmem:[#allocation5 + $0x510] sm:$0xff]
    %v217 = vld [vmem:[#allocation5 + $0x518] sm:$0xff]
    %v218 = vld [vmem:[#allocation5 + $0x520] sm:$0xff]
    %v219 = vld [vmem:[#allocation5 + $0x528] sm:$0xff]
    %v220 = vld [vmem:[#allocation5 + $0x530] sm:$0xff]
    %v221 = vld [vmem:[#allocation5 + $0x538] sm:$0xff]
    %v222 = vld [vmem:[#allocation5 + $0x540] sm:$0xff]
    %v223 = vld [vmem:[#allocation5 + $0x548] sm:$0xff]
    %v224 = vld [vmem:[#allocation5 + $0x550] sm:$0xff]
    %v225 = vld [vmem:[#allocation5 + $0x558] sm:$0xff]
    %v226 = vld [vmem:[#allocation5 + $0x560] sm:$0xff]
    %v227 = vld [vmem:[#allocation5 + $0x568] sm:$0xff]
    %v228 = vld [vmem:[#allocation5 + $0x570] sm:$0xff]
    %v229 = vld [vmem:[#allocation5 + $0x578] sm:$0xff]
    %v230 = vld [vmem:[#allocation5 + $0x580] sm:$0xff]
    %v231 = vld [vmem:[#allocation5 + $0x588] sm:$0xff]
    %v232 = vld [vmem:[#allocation5 + $0x590] sm:$0xff]
    %v233 = vld [vmem:[#allocation5 + $0x598] sm:$0xff]
    %v234 = vld [vmem:[#allocation5 + $0x5a0] sm:$0xff]
    %v235 = vld [vmem:[#allocation5 + $0x5a8] sm:$0xff]
    %v236 = vld [vmem:[#allocation5 + $0x5b0] sm:$0xff]
    %v237 = vld [vmem:[#allocation5 + $0x5b8] sm:$0xff]
    %v238 = vld [vmem:[#allocation5 + $0x5c0] sm:$0xff]
    %v239 = vld [vmem:[#allocation5 + $0x5c8] sm:$0xff]
    %v240 = vld [vmem:[#allocation5 + $0x5d0] sm:$0xff]
    %v241 = vld [vmem:[#allocation5 + $0x5d8] sm:$0xff]
    %v242 = vld [vmem:[#allocation5 + $0x5e0] sm:$0xff]
    %v243 = vld [vmem:[#allocation5 + $0x5e8] sm:$0xff]
    %v244 = vld [vmem:[#allocation5 + $0x5f0] sm:$0xff]
    %v245 = vld [vmem:[#allocation5 + $0x5f8] sm:$0xff]
    %v246 = vld [vmem:[#allocation5 + $0x600] sm:$0xff]
    %v247 = vld [vmem:[#allocation5 + $0x608] sm:$0xff]
    %v248 = vld [vmem:[#allocation5 + $0x610] sm:$0xff]
    %v249 = vld [vmem:[#allocation5 + $0x618] sm:$0xff]
    %v250 = vld [vmem:[#allocation5 + $0x620] sm:$0xff]
    %v251 = vld [vmem:[#allocation5 + $0x628] sm:$0xff]
    %v252 = vld [vmem:[#allocation5 + $0x630] sm:$0xff]
    %v253 = vld [vmem:[#allocation5 + $0x638] sm:$0xff]
    %v254 = vld [vmem:[#allocation5 + $0x640] sm:$0xff]
    %v255 = vld [vmem:[#allocation5 + $0x648] sm:$0xff]
    %v256 = vld [vmem:[#allocation5 + $0x650] sm:$0xff]
    %v257 = vld [vmem:[#allocation5 + $0x658] sm:$0xff]
    %v258 = vld [vmem:[#allocation5 + $0x660] sm:$0xff]
    %v259 = vld [vmem:[#allocation5 + $0x668] sm:$0xff]
    %v260 = vld [vmem:[#allocation5 + $0x670] sm:$0xff]
    %v261 = vld [vmem:[#allocation5 + $0x678] sm:$0xff]
    %v262 = vld [vmem:[#allocation5 + $0x680] sm:$0xff]
    %v263 = vld [vmem:[#allocation5 + $0x688] sm:$0xff]
    %v264 = vld [vmem:[#allocation5 + $0x690] sm:$0xff]
    %v265 = vld [vmem:[#allocation5 + $0x698] sm:$0xff]
    %v266 = vld [vmem:[#allocation5 + $0x6a0] sm:$0xff]
    %v267 = vld [vmem:[#allocation5 + $0x6a8] sm:$0xff]
    %v268 = vld [vmem:[#allocation5 + $0x6b0] sm:$0xff]
    %v269 = vld [vmem:[#allocation5 + $0x6b8] sm:$0xff]
    %v270 = vld [vmem:[#allocation5 + $0x6c0] sm:$0xff]
    %v271 = vld [vmem:[#allocation5 + $0x6c8] sm:$0xff]
    %v272 = vld [vmem:[#allocation5 + $0x6d0] sm:$0xff]
    %v273 = vld [vmem:[#allocation5 + $0x6d8] sm:$0xff]
    %v274 = vld [vmem:[#allocation5 + $0x6e0] sm:$0xff]
    %v275 = vld [vmem:[#allocation5 + $0x6e8] sm:$0xff]
    %v276 = vld [vmem:[#allocation5 + $0x6f0] sm:$0xff]
    %v277 = vld [vmem:[#allocation5 + $0x6f8] sm:$0xff]
    %v278 = vld [vmem:[#allocation5 + $0x700] sm:$0xff]
    %v279 = vld [vmem:[#allocation5 + $0x708] sm:$0xff]
    %v280 = vld [vmem:[#allocation5 + $0x710] sm:$0xff]
    %v281 = vld [vmem:[#allocation5 + $0x718] sm:$0xff]
    %v282 = vld [vmem:[#allocation5 + $0x720] sm:$0xff]
    %v283 = vld [vmem:[#allocation5 + $0x728] sm:$0xff]
    %v284 = vld [vmem:[#allocation5 + $0x730] sm:$0xff]
    %v285 = vld [vmem:[#allocation5 + $0x738] sm:$0xff]
    %v286 = vld [vmem:[#allocation5 + $0x740] sm:$0xff]
    %v287 = vld [vmem:[#allocation5 + $0x748] sm:$0xff]
    %v288 = vld [vmem:[#allocation5 + $0x750] sm:$0xff]
    %v289 = vld [vmem:[#allocation5 + $0x758] sm:$0xff]
    %v290 = vld [vmem:[#allocation5 + $0x760] sm:$0xff]
    %v291 = vld [vmem:[#allocation5 + $0x768] sm:$0xff]
    %v292 = vld [vmem:[#allocation5 + $0x770] sm:$0xff]
    %v293 = vld [vmem:[#allocation5 + $0x778] sm:$0xff]
    %v294 = vld [vmem:[#allocation5 + $0x780] sm:$0xff]
    %v295 = vld [vmem:[#allocation5 + $0x788] sm:$0xff]
    %v296 = vld [vmem:[#allocation5 + $0x790] sm:$0xff]
    %v297 = vld [vmem:[#allocation5 + $0x798] sm:$0xff]
    %v298 = vld [vmem:[#allocation5 + $0x7a0] sm:$0xff]
    %v299 = vld [vmem:[#allocation5 + $0x7a8] sm:$0xff]
    %v300 = vld [vmem:[#allocation5 + $0x7b0] sm:$0xff]
    %v301 = vld [vmem:[#allocation5 + $0x7b8] sm:$0xff]
    %v302 = vld [vmem:[#allocation5 + $0x7c0] sm:$0xff]
    %v303 = vld [vmem:[#allocation5 + $0x7c8] sm:$0xff]
    %v304 = vld [vmem:[#allocation5 + $0x7d0] sm:$0xff]
    %v305 = vld [vmem:[#allocation5 + $0x7d8] sm:$0xff]
    %v306 = vld [vmem:[#allocation5 + $0x7e0] sm:$0xff]
    %v307 = vld [vmem:[#allocation5 + $0x7e8] sm:$0xff]
    %v308 = vld [vmem:[#allocation5 + $0x7f0] sm:$0xff]
    %v309 = vld [vmem:[#allocation5 + $0x7f8] sm:$0xff]
    %v310 = vld [vmem:[#allocation5 + $0x800] sm:$0xff]
    %v311 = vld [vmem:[#allocation5 + $0x808] sm:$0xff]
    %v312 = vld [vmem:[#allocation5 + $0x810] sm:$0xff]
    %v313 = vld [vmem:[#allocation5 + $0x818] sm:$0xff]
    %v314 = vld [vmem:[#allocation5 + $0x820] sm:$0xff]
    %v315 = vld [vmem:[#allocation5 + $0x828] sm:$0xff]
    %v316 = vld [vmem:[#allocation5 + $0x830] sm:$0xff]
    %v317 = vld [vmem:[#allocation5 + $0x838] sm:$0xff]
    %v318 = vld [vmem:[#allocation5 + $0x840] sm:$0xff]
    %v319 = vld [vmem:[#allocation5 + $0x848] sm:$0xff]
    %v320 = vld [vmem:[#allocation5 + $0x850] sm:$0xff]
    %v321 = vld [vmem:[#allocation5 + $0x858] sm:$0xff]
    %v322 = vld [vmem:[#allocation5 + $0x860] sm:$0xff]
    %v323 = vld [vmem:[#allocation5 + $0x868] sm:$0xff]
    %v324 = vld [vmem:[#allocation5 + $0x870] sm:$0xff]
    %v325 = vld [vmem:[#allocation5 + $0x878] sm:$0xff]
    %v326 = vld [vmem:[#allocation5 + $0x880] sm:$0xff]
    %v327 = vld [vmem:[#allocation5 + $0x888] sm:$0xff]
    %v328 = vld [vmem:[#allocation5 + $0x890] sm:$0xff]
    %v329 = vld [vmem:[#allocation5 + $0x898] sm:$0xff]
    %v330 = vld [vmem:[#allocation5 + $0x8a0] sm:$0xff]
    %v331 = vld [vmem:[#allocation5 + $0x8a8] sm:$0xff]
    %v332 = vld [vmem:[#allocation5 + $0x8b0] sm:$0xff]
    %v333 = vld [vmem:[#allocation5 + $0x8b8] sm:$0xff]
    %v334 = vld [vmem:[#allocation5 + $0x8c0] sm:$0xff]
    %v335 = vld [vmem:[#allocation5 + $0x8c8] sm:$0xff]
    %v336 = vld [vmem:[#allocation5 + $0x8d0] sm:$0xff]
    %v337 = vld [vmem:[#allocation5 + $0x8d8] sm:$0xff]
    %v338 = vld [vmem:[#allocation5 + $0x8e0] sm:$0xff]
    %v339 = vld [vmem:[#allocation5 + $0x8e8] sm:$0xff]
    %v340 = vld [vmem:[#allocation5 + $0x8f0] sm:$0xff]
    %v341 = vld [vmem:[#allocation5 + $0x8f8] sm:$0xff]
    %v342 = vld [vmem:[#allocation5 + $0x900] sm:$0xff]
    %v343 = vld [vmem:[#allocation5 + $0x908] sm:$0xff]
    %v344 = vld [vmem:[#allocation5 + $0x910] sm:$0xff]
    %v345 = vld [vmem:[#allocation5 + $0x918] sm:$0xff]
    %v346 = vld [vmem:[#allocation5 + $0x920] sm:$0xff]
    %v347 = vld [vmem:[#allocation5 + $0x928] sm:$0xff]
    %v348 = vld [vmem:[#allocation5 + $0x930] sm:$0xff]
    %v349 = vld [vmem:[#allocation5 + $0x938] sm:$0xff]
    %v350 = vld [vmem:[#allocation5 + $0x940] sm:$0xff]
    %v351 = vld [vmem:[#allocation5 + $0x948] sm:$0xff]
    %v352 = vld [vmem:[#allocation5 + $0x950] sm:$0xff]
    %v353 = vld [vmem:[#allocation5 + $0x958] sm:$0xff]
    %v354 = vld [vmem:[#allocation5 + $0x960] sm:$0xff]
    %v355 = vld [vmem:[#allocation5 + $0x968] sm:$0xff]
    %v356 = vld [vmem:[#allocation5 + $0x970] sm:$0xff]
    %v357 = vld [vmem:[#allocation5 + $0x978] sm:$0xff]
    %v358 = vld [vmem:[#allocation5 + $0x980] sm:$0xff]
    %v359 = vld [vmem:[#allocation5 + $0x988] sm:$0xff]
    %v360 = vld [vmem:[#allocation5 + $0x990] sm:$0xff]
    %v361 = vld [vmem:[#allocation5 + $0x998] sm:$0xff]
    %v362 = vld [vmem:[#allocation5 + $0x9a0] sm:$0xff]
    %v363 = vld [vmem:[#allocation5 + $0x9a8] sm:$0xff]
    %v364 = vld [vmem:[#allocation5 + $0x9b0] sm:$0xff]
    %v365 = vld [vmem:[#allocation5 + $0x9b8] sm:$0xff]
    %v366 = vld [vmem:[#allocation5 + $0x9c0] sm:$0xff]
    %v367 = vld [vmem:[#allocation5 + $0x9c8] sm:$0xff]
    %v368 = vld [vmem:[#allocation5 + $0x9d0] sm:$0xff]
    %v369 = vld [vmem:[#allocation5 + $0x9d8] sm:$0xff]
    %v370 = vld [vmem:[#allocation5 + $0x9e0] sm:$0xff]
    %v371 = vld [vmem:[#allocation5 + $0x9e8] sm:$0xff]
    %v372 = vld [vmem:[#allocation5 + $0x9f0] sm:$0xff]
    %v373 = vld [vmem:[#allocation5 + $0x9f8] sm:$0xff]
    %v374 = vld [vmem:[#allocation5 + $0xa00] sm:$0xff]
    %v375 = vld [vmem:[#allocation5 + $0xa08] sm:$0xff]
    %v376 = vld [vmem:[#allocation5 + $0xa10] sm:$0xff]
    %v377 = vld [vmem:[#allocation5 + $0xa18] sm:$0xff]
    %v378 = vld [vmem:[#allocation5 + $0xa20] sm:$0xff]
    %v379 = vld [vmem:[#allocation5 + $0xa28] sm:$0xff]
    %v380 = vld [vmem:[#allocation5 + $0xa30] sm:$0xff]
    %v381 = vld [vmem:[#allocation5 + $0xa38] sm:$0xff]
    %v382 = vld [vmem:[#allocation5 + $0xa40] sm:$0xff]
    %v383 = vld [vmem:[#allocation5 + $0xa48] sm:$0xff]
    %v384 = vld [vmem:[#allocation5 + $0xa50] sm:$0xff]
    %v385 = vld [vmem:[#allocation5 + $0xa58] sm:$0xff]
    %v386 = vld [vmem:[#allocation5 + $0xa60] sm:$0xff]
    %v387 = vld [vmem:[#allocation5 + $0xa68] sm:$0xff]
    %v388 = vld [vmem:[#allocation5 + $0xa70] sm:$0xff]
    %v389 = vld [vmem:[#allocation5 + $0xa78] sm:$0xff]
    %v390 = vld [vmem:[#allocation5 + $0xa80] sm:$0xff]
    %v391 = vld [vmem:[#allocation5 + $0xa88] sm:$0xff]
    %v392 = vld [vmem:[#allocation5 + $0xa90] sm:$0xff]
    %v393 = vld [vmem:[#allocation5 + $0xa98] sm:$0xff]
    %v394 = vld [vmem:[#allocation5 + $0xaa0] sm:$0xff]
    %v395 = vld [vmem:[#allocation5 + $0xaa8] sm:$0xff]
    %v396 = vld [vmem:[#allocation5 + $0xab0] sm:$0xff]
    %v397 = vld [vmem:[#allocation5 + $0xab8] sm:$0xff]
    %v398 = vld [vmem:[#allocation5 + $0xac0] sm:$0xff]
    %v399 = vld [vmem:[#allocation5 + $0xac8] sm:$0xff]
    %v400 = vld [vmem:[#allocation5 + $0xad0] sm:$0xff]
    %v401 = vld [vmem:[#allocation5 + $0xad8] sm:$0xff]
    %v402 = vld [vmem:[#allocation5 + $0xae0] sm:$0xff]
    %v403 = vld [vmem:[#allocation5 + $0xae8] sm:$0xff]
    %v404 = vld [vmem:[#allocation5 + $0xaf0] sm:$0xff]
    %v405 = vld [vmem:[#allocation5 + $0xaf8] sm:$0xff]
    %v406 = vld [vmem:[#allocation5 + $0xb00] sm:$0xff]
    %v407 = vld [vmem:[#allocation5 + $0xb08] sm:$0xff]
    %v408 = vld [vmem:[#allocation5 + $0xb10] sm:$0xff]
    %v409 = vld [vmem:[#allocation5 + $0xb18] sm:$0xff]
    %v410 = vld [vmem:[#allocation5 + $0xb20] sm:$0xff]
    %v411 = vld [vmem:[#allocation5 + $0xb28] sm:$0xff]
    %v412 = vld [vmem:[#allocation5 + $0xb30] sm:$0xff]
    %v413 = vld [vmem:[#allocation5 + $0xb38] sm:$0xff]
    %v414 = vld [vmem:[#allocation5 + $0xb40] sm:$0xff]
    %v415 = vld [vmem:[#allocation5 + $0xb48] sm:$0xff]
    %v416 = vld [vmem:[#allocation5 + $0xb50] sm:$0xff]
    %v417 = vld [vmem:[#allocation5 + $0xb58] sm:$0xff]
    %v418 = vld [vmem:[#allocation5 + $0xb60] sm:$0xff]
    %v419 = vld [vmem:[#allocation5 + $0xb68] sm:$0xff]
    %v420 = vld [vmem:[#allocation5 + $0xb70] sm:$0xff]
    %v421 = vld [vmem:[#allocation5 + $0xb78] sm:$0xff]
    %v422 = vld [vmem:[#allocation5 + $0xb80] sm:$0xff]
    %v423 = vld [vmem:[#allocation5 + $0xb88] sm:$0xff]
    %v424 = vld [vmem:[#allocation5 + $0xb90] sm:$0xff]
    %v425 = vld [vmem:[#allocation5 + $0xb98] sm:$0xff]
    %v426 = vld [vmem:[#allocation5 + $0xba0] sm:$0xff]
    %v427 = vld [vmem:[#allocation5 + $0xba8] sm:$0xff]
    %v428 = vld [vmem:[#allocation5 + $0xbb0] sm:$0xff]
    %v429 = vld [vmem:[#allocation5 + $0xbb8] sm:$0xff]
    %v430 = vld [vmem:[#allocation5 + $0xbc0] sm:$0xff]
    %v431 = vld [vmem:[#allocation5 + $0xbc8] sm:$0xff]
    %v432 = vld [vmem:[#allocation5 + $0xbd0] sm:$0xff]
    %v433 = vld [vmem:[#allocation5 + $0xbd8] sm:$0xff]
    %v434 = vld [vmem:[#allocation5 + $0xbe0] sm:$0xff]
    %v435 = vld [vmem:[#allocation5 + $0xbe8] sm:$0xff]
    %v436 = vld [vmem:[#allocation5 + $0xbf0] sm:$0xff]
    %v437 = vld [vmem:[#allocation5 + $0xbf8] sm:$0xff]
    %v438 = vld [vmem:[#allocation5 + $0xc00] sm:$0xff]
    %v439 = vld [vmem:[#allocation5 + $0xc08] sm:$0xff]
    %v440 = vld [vmem:[#allocation5 + $0xc10] sm:$0xff]
    %v441 = vld [vmem:[#allocation5 + $0xc18] sm:$0xff]
    %v442 = vld [vmem:[#allocation5 + $0xc20] sm:$0xff]
    %v443 = vld [vmem:[#allocation5 + $0xc28] sm:$0xff]
    %v444 = vld [vmem:[#allocation5 + $0xc30] sm:$0xff]
    %v445 = vld [vmem:[#allocation5 + $0xc38] sm:$0xff]
    %v446 = vld [vmem:[#allocation7] sm:$0xf]
    %v448 = vlaneseq
    %v449 = vshrl.u32 %v448, 7
    %v450 = vsub.s32 0, %v449
    %v451 = vrot.slane %v446, %v450
    %v452 = vlaneseq
    %v453 = vshrl.u32 %v452, 7
    %v454 = vsub.s32 1, %v453
    %v455 = vrot.slane %v446, %v454
    %v456 = vlaneseq
    %v457 = vshrl.u32 %v456, 7
    %v458 = vsub.s32 2, %v457
    %v459 = vrot.slane %v446, %v458
    %v460 = vlaneseq
    %v461 = vshrl.u32 %v460, 7
    %v462 = vsub.s32 3, %v461
    %v463 = vrot.slane %v446, %v462
    %v470 = vcombine.high %v52, %v52
    %v472 = vunpack.c.l.s4 1983009808
    %v473 = vunpack.c.0.s8 %v472
    %v474 = vlaneseq
    %v475 = vshrl.u32 %v474, 7
    %v476 = vsub.s32 %v473, %v475
    %v477 = vrot.slane %v52, %v476
    %v479 = vunpack.c.l.s4 1983009808
    %v480 = vunpack.c.0.s8 %v479
    %v481 = vlaneseq
    %v482 = vshrl.u32 %v481, 7
    %v483 = vsub.s32 %v480, %v482
    %v484 = vrot.slane %v470, %v483
    %v485 = vcombine.high %v477, %v477
    %v486 = vcombine.high %v484, %v484
    %v487 = vcombine.high %v53, %v53
    %v489 = vunpack.c.l.s4 1983009808
    %v490 = vunpack.c.0.s8 %v489
    %v491 = vlaneseq
    %v492 = vshrl.u32 %v491, 7
    %v493 = vsub.s32 %v490, %v492
    %v494 = vrot.slane %v53, %v493
    %v496 = vunpack.c.l.s4 1983009808
    %v497 = vunpack.c.0.s8 %v496
    %v498 = vlaneseq
    %v499 = vshrl.u32 %v498, 7
    %v500 = vsub.s32 %v497, %v499
    %v501 = vrot.slane %v487, %v500
    %v502 = vcombine.high %v494, %v494
    %vm509 = vcmask 130048
    %v510 = vsel %vm509, %v501, 0
    %512 = vmatprep.subr.mxu0 %v115
    %513 = vmatpush1.msra.mxu0 %v114
    %514 = vmatprep.subr.mxu0 %v111
    %515 = vmatpush1.msra.mxu0 %v110
    %516 = vmatprep.subr.mxu0 %v107
    %517 = vmatpush1.msra.mxu0 %v106
    %518 = vmatprep.subr.mxu0 %v103
    %519 = vmatpush1.msra.mxu0 %v102
    %520 = vmatprep.subr.mxu0 %v99
    %521 = vmatpush1.msra.mxu0 %v98
    %522 = vmatprep.subr.mxu0 %v95
    %523 = vmatpush1.msra.mxu0 %v94
    %524 = vmatprep.subr.mxu0 %v91
    %525 = vmatpush1.msra.mxu0 %v90
    %526 = vmatprep.subr.mxu0 %v87
    %527 = vmatpush1.msra.mxu0 %v86
    %528 = vmatprep.subr.mxu0 %v83
    %529 = vmatpush1.msra.mxu0 %v82
    %530 = vmatprep.subr.mxu0 %v79
    %531 = vmatpush1.msra.mxu0 %v78
    %532 = vmatprep.subr.mxu0 %v75
    %533 = vmatpush1.msra.mxu0 %v74
    %534 = vmatprep.subr.mxu0 %v71
    %535 = vmatpush1.msra.mxu0 %v70
    %536 = vmatprep.subr.mxu0 %v67
    %537 = vmatpush1.msra.mxu0 %v66
    %538 = vmatprep.subr.mxu0 %v63
    %539 = vmatpush1.msra.mxu0 %v62
    %540 = vmatprep.subr.mxu0 %v59
    %541 = vmatpush1.msra.mxu0 %v58
    %542 = vmatprep.subr.mxu0 %v55
    %543 = vmatpush1.msra.mxu0 %v54
    %544 = vmatprep.subr.mxu0 %v179
    %545 = vmatpush2.msra.mxu0 %v178
    %546 = vmatprep.subr.mxu0 %v175
    %547 = vmatpush2.msra.mxu0 %v174
    %548 = vmatprep.subr.mxu0 %v171
    %549 = vmatpush2.msra.mxu0 %v170
    %550 = vmatprep.subr.mxu0 %v167
    %551 = vmatpush2.msra.mxu0 %v166
    %552 = vmatprep.subr.mxu0 %v163
    %553 = vmatpush2.msra.mxu0 %v162
    %554 = vmatprep.subr.mxu0 %v159
    %555 = vmatpush2.msra.mxu0 %v158
    %556 = vmatprep.subr.mxu0 %v155
    %557 = vmatpush2.msra.mxu0 %v154
    %558 = vmatprep.subr.mxu0 %v151
    %559 = vmatpush2.msra.mxu0 %v150
    %560 = vmatprep.subr.mxu0 %v147
    %561 = vmatpush2.msra.mxu0 %v146
    %562 = vmatprep.subr.mxu0 %v143
    %563 = vmatpush2.msra.mxu0 %v142
    %564 = vmatprep.subr.mxu0 %v139
    %565 = vmatpush2.msra.mxu0 %v138
    %566 = vmatprep.subr.mxu0 %v135
    %567 = vmatpush2.msra.mxu0 %v134
    %568 = vmatprep.subr.mxu0 %v131
    %569 = vmatpush2.msra.mxu0 %v130
    %570 = vmatprep.subr.mxu0 %v127
    %571 = vmatpush2.msra.mxu0 %v126
    %572 = vmatprep.subr.mxu0 %v123
    %573 = vmatpush2.msra.mxu0 %v122
    %574 = vmatprep.subr.mxu0 %v119
    %575 = vmatpush2.msra.mxu0 %v118
    %576 = vmatprep.mubr.f32.mxu0 %v485
    %577 = vmatmul.mubr.f32.gmra.mxu0 %v477
    %v578 = vpop.f32.mrf.mxu0
    %v579 = vadd.f32 %v451, %v578
    %v580 = vpop.f32.mrf.mxu0
    %v581 = vadd.f32 %v455, %v580
    %582 = vdwg.mxu0
    %583 = vmatprep.subr.mxu0 %v243
    %584 = vmatpush1.msra.mxu0 %v242
    %585 = vmatprep.subr.mxu0 %v239
    %586 = vmatpush1.msra.mxu0 %v238
    %587 = vmatprep.subr.mxu0 %v235
    %588 = vmatpush1.msra.mxu0 %v234
    %589 = vmatprep.subr.mxu0 %v231
    %590 = vmatpush1.msra.mxu0 %v230
    %591 = vmatprep.subr.mxu0 %v227
    %592 = vmatpush1.msra.mxu0 %v226
    %593 = vmatprep.subr.mxu0 %v223
    %594 = vmatpush1.msra.mxu0 %v222
    %595 = vmatprep.subr.mxu0 %v219
    %596 = vmatpush1.msra.mxu0 %v218
    %597 = vmatprep.subr.mxu0 %v215
    %598 = vmatpush1.msra.mxu0 %v214
    %599 = vmatprep.subr.mxu0 %v211
    %600 = vmatpush1.msra.mxu0 %v210
    %601 = vmatprep.subr.mxu0 %v207
    %602 = vmatpush1.msra.mxu0 %v206
    %603 = vmatprep.subr.mxu0 %v203
    %604 = vmatpush1.msra.mxu0 %v202
    %605 = vmatprep.subr.mxu0 %v199
    %606 = vmatpush1.msra.mxu0 %v198
    %607 = vmatprep.subr.mxu0 %v195
    %608 = vmatpush1.msra.mxu0 %v194
    %609 = vmatprep.subr.mxu0 %v191
    %610 = vmatpush1.msra.mxu0 %v190
    %611 = vmatprep.subr.mxu0 %v187
    %612 = vmatpush1.msra.mxu0 %v186
    %613 = vmatprep.subr.mxu0 %v183
    %614 = vmatpush1.msra.mxu0 %v182
    %615 = vmatprep.subr.mxu0 %v307
    %616 = vmatpush2.msra.mxu0 %v306
    %617 = vmatprep.subr.mxu0 %v303
    %618 = vmatpush2.msra.mxu0 %v302
    %619 = vmatprep.subr.mxu0 %v299
    %620 = vmatpush2.msra.mxu0 %v298
    %621 = vmatprep.subr.mxu0 %v295
    %622 = vmatpush2.msra.mxu0 %v294
    %623 = vmatprep.subr.mxu0 %v291
    %624 = vmatpush2.msra.mxu0 %v290
    %625 = vmatprep.subr.mxu0 %v287
    %626 = vmatpush2.msra.mxu0 %v286
    %627 = vmatprep.subr.mxu0 %v283
    %628 = vmatpush2.msra.mxu0 %v282
    %629 = vmatprep.subr.mxu0 %v279
    %630 = vmatpush2.msra.mxu0 %v278
    %631 = vmatprep.subr.mxu0 %v275
    %632 = vmatpush2.msra.mxu0 %v274
    %633 = vmatprep.subr.mxu0 %v271
    %634 = vmatpush2.msra.mxu0 %v270
    %635 = vmatprep.subr.mxu0 %v267
    %636 = vmatpush2.msra.mxu0 %v266
    %637 = vmatprep.subr.mxu0 %v263
    %638 = vmatpush2.msra.mxu0 %v262
    %639 = vmatprep.subr.mxu0 %v259
    %640 = vmatpush2.msra.mxu0 %v258
    %641 = vmatprep.subr.mxu0 %v255
    %642 = vmatpush2.msra.mxu0 %v254
    %643 = vmatprep.subr.mxu0 %v251
    %644 = vmatpush2.msra.mxu0 %v250
    %645 = vmatprep.subr.mxu0 %v247
    %646 = vmatpush2.msra.mxu0 %v246
    %647 = vmatprep.mubr.f32.mxu0 %v486
    %648 = vmatmul.mubr.f32.gmra.mxu0 %v484
    %v649 = vpop.f32.mrf.mxu0
    %v650 = vadd.f32 %v579, %v649
    %v651 = vpop.f32.mrf.mxu0
    %v652 = vadd.f32 %v581, %v651
    %653 = vdwg.mxu0
    %654 = vmatprep.subr.mxu0 %v371
    %655 = vmatpush1.msra.mxu0 %v370
    %656 = vmatprep.subr.mxu0 %v367
    %657 = vmatpush1.msra.mxu0 %v366
    %658 = vmatprep.subr.mxu0 %v363
    %659 = vmatpush1.msra.mxu0 %v362
    %660 = vmatprep.subr.mxu0 %v359
    %661 = vmatpush1.msra.mxu0 %v358
    %662 = vmatprep.subr.mxu0 %v355
    %663 = vmatpush1.msra.mxu0 %v354
    %664 = vmatprep.subr.mxu0 %v351
    %665 = vmatpush1.msra.mxu0 %v350
    %666 = vmatprep.subr.mxu0 %v347
    %667 = vmatpush1.msra.mxu0 %v346
    %668 = vmatprep.subr.mxu0 %v343
    %669 = vmatpush1.msra.mxu0 %v342
    %670 = vmatprep.subr.mxu0 %v339
    %671 = vmatpush1.msra.mxu0 %v338
    %672 = vmatprep.subr.mxu0 %v335
    %673 = vmatpush1.msra.mxu0 %v334
    %674 = vmatprep.subr.mxu0 %v331
    %675 = vmatpush1.msra.mxu0 %v330
    %676 = vmatprep.subr.mxu0 %v327
    %677 = vmatpush1.msra.mxu0 %v326
    %678 = vmatprep.subr.mxu0 %v323
    %679 = vmatpush1.msra.mxu0 %v322
    %680 = vmatprep.subr.mxu0 %v319
    %681 = vmatpush1.msra.mxu0 %v318
    %682 = vmatprep.subr.mxu0 %v315
    %683 = vmatpush1.msra.mxu0 %v314
    %684 = vmatprep.subr.mxu0 %v311
    %685 = vmatpush1.msra.mxu0 %v310
    %686 = vmatprep.subr.mxu0 %v435
    %687 = vmatpush2.msra.mxu0 %v434
    %688 = vmatprep.subr.mxu0 %v431
    %689 = vmatpush2.msra.mxu0 %v430
    %690 = vmatprep.subr.mxu0 %v427
    %691 = vmatpush2.msra.mxu0 %v426
    %692 = vmatprep.subr.mxu0 %v423
    %693 = vmatpush2.msra.mxu0 %v422
    %694 = vmatprep.subr.mxu0 %v419
    %695 = vmatpush2.msra.mxu0 %v418
    %696 = vmatprep.subr.mxu0 %v415
    %697 = vmatpush2.msra.mxu0 %v414
    %698 = vmatprep.subr.mxu0 %v411
    %699 = vmatpush2.msra.mxu0 %v410
    %700 = vmatprep.subr.mxu0 %v407
    %701 = vmatpush2.msra.mxu0 %v406
    %702 = vmatprep.subr.mxu0 %v403
    %703 = vmatpush2.msra.mxu0 %v402
    %704 = vmatprep.subr.mxu0 %v399
    %705 = vmatpush2.msra.mxu0 %v398
    %706 = vmatprep.subr.mxu0 %v395
    %707 = vmatpush2.msra.mxu0 %v394
    %708 = vmatprep.subr.mxu0 %v391
    %709 = vmatpush2.msra.mxu0 %v390
    %710 = vmatprep.subr.mxu0 %v387
    %711 = vmatpush2.msra.mxu0 %v386
    %712 = vmatprep.subr.mxu0 %v383
    %713 = vmatpush2.msra.mxu0 %v382
    %714 = vmatprep.subr.mxu0 %v379
    %715 = vmatpush2.msra.mxu0 %v378
    %716 = vmatprep.subr.mxu0 %v375
    %717 = vmatpush2.msra.mxu0 %v374
    %718 = vmatprep.mubr.f32.mxu0 %v502
    %719 = vmatmul.mubr.f32.gmra.mxu0 %v494
    %v720 = vpop.f32.mrf.mxu0
    %v721 = vadd.f32 %v650, %v720
    %v722 = vpop.f32.mrf.mxu0
    %v723 = vadd.f32 %v652, %v722
    %724 = vdwg.mxu0
    %725 = vmatprep.subr.mxu0 0.0
    %726 = vmatpush1.msra.mxu0 0.0
    %727 = vmatprep.subr.mxu0 0.0
    %728 = vmatpush1.msra.mxu0 0.0
    %729 = vmatprep.subr.mxu0 0.0
    %730 = vmatpush1.msra.mxu0 0.0
    %731 = vmatprep.subr.mxu0 0.0
    %732 = vmatpush1.msra.mxu0 0.0
    %733 = vmatprep.subr.mxu0 0.0
    %734 = vmatpush1.msra.mxu0 0.0
    %735 = vmatprep.subr.mxu0 0.0
    %736 = vmatpush1.msra.mxu0 0.0
    %737 = vmatprep.subr.mxu0 0.0
    %738 = vmatpush1.msra.mxu0 0.0
    %739 = vmatprep.subr.mxu0 0.0
    %740 = vmatpush1.msra.mxu0 0.0
    %741 = vmatprep.subr.mxu0 0.0
    %742 = vmatpush1.msra.mxu0 0.0
    %743 = vmatprep.subr.mxu0 0.0
    %744 = vmatpush1.msra.mxu0 0.0
    %745 = vmatprep.subr.mxu0 0.0
    %746 = vmatpush1.msra.mxu0 0.0
    %747 = vmatprep.subr.mxu0 0.0
    %748 = vmatpush1.msra.mxu0 0.0
    %749 = vmatprep.subr.mxu0 0.0
    %750 = vmatpush1.msra.mxu0 0.0
    %751 = vmatprep.subr.mxu0 0.0
    %752 = vmatpush1.msra.mxu0 0.0
    %753 = vmatprep.subr.mxu0 %v443
    %754 = vmatpush1.msra.mxu0 %v442
    %755 = vmatprep.subr.mxu0 %v439
    %756 = vmatpush1.msra.mxu0 %v438
    %757 = vmatprep.subr.mxu0 0.0
    %758 = vmatpush2.msra.mxu0 0.0
    %759 = vmatprep.subr.mxu0 0.0
    %760 = vmatpush2.msra.mxu0 0.0
    %761 = vmatprep.subr.mxu0 0.0
    %762 = vmatpush2.msra.mxu0 0.0
    %763 = vmatprep.subr.mxu0 0.0
    %764 = vmatpush2.msra.mxu0 0.0
    %765 = vmatprep.subr.mxu0 0.0
    %766 = vmatpush2.msra.mxu0 0.0
    %767 = vmatprep.subr.mxu0 0.0
    %768 = vmatpush2.msra.mxu0 0.0
    %769 = vmatprep.subr.mxu0 0.0
    %770 = vmatpush2.msra.mxu0 0.0
    %771 = vmatprep.subr.mxu0 0.0
    %772 = vmatpush2.msra.mxu0 0.0
    %773 = vmatprep.subr.mxu0 0.0
    %774 = vmatpush2.msra.mxu0 0.0
    %775 = vmatprep.subr.mxu0 0.0
    %776 = vmatpush2.msra.mxu0 0.0
    %777 = vmatprep.subr.mxu0 0.0
    %778 = vmatpush2.msra.mxu0 0.0
    %779 = vmatprep.subr.mxu0 0.0
    %780 = vmatpush2.msra.mxu0 0.0
    %781 = vmatprep.subr.mxu0 0.0
    %782 = vmatpush2.msra.mxu0 0.0
    %783 = vmatprep.subr.mxu0 0.0
    %784 = vmatpush2.msra.mxu0 0.0
    %785 = vmatprep.subr.mxu0 0.0
    %786 = vmatpush2.msra.mxu0 0.0
    %787 = vmatprep.subr.mxu0 0.0
    %788 = vmatpush2.msra.mxu0 0.0
    %789 = vmatprep.mubr.f32.mxu0 0.0
    %790 = vmatmul.mubr.f32.gmra.mxu0 %v510
    %v791 = vpop.f32.mrf.mxu0
    %v792 = vadd.f32 %v721, %v791
    %v793 = vpop.f32.mrf.mxu0
    %v794 = vadd.f32 %v723, %v793
    %795 = vdwg.mxu0
    %796 = vmatprep.subr.mxu0 %v117
    %797 = vmatpush1.msra.mxu0 %v116
    %798 = vmatprep.subr.mxu0 %v113
    %799 = vmatpush1.msra.mxu0 %v112
    %800 = vmatprep.subr.mxu0 %v109
    %801 = vmatpush1.msra.mxu0 %v108
    %802 = vmatprep.subr.mxu0 %v105
    %803 = vmatpush1.msra.mxu0 %v104
    %804 = vmatprep.subr.mxu0 %v101
    %805 = vmatpush1.msra.mxu0 %v100
    %806 = vmatprep.subr.mxu0 %v97
    %807 = vmatpush1.msra.mxu0 %v96
    %808 = vmatprep.subr.mxu0 %v93
    %809 = vmatpush1.msra.mxu0 %v92
    %810 = vmatprep.subr.mxu0 %v89
    %811 = vmatpush1.msra.mxu0 %v88
    %812 = vmatprep.subr.mxu0 %v85
    %813 = vmatpush1.msra.mxu0 %v84
    %814 = vmatprep.subr.mxu0 %v81
    %815 = vmatpush1.msra.mxu0 %v80
    %816 = vmatprep.subr.mxu0 %v77
    %817 = vmatpush1.msra.mxu0 %v76
    %818 = vmatprep.subr.mxu0 %v73
    %819 = vmatpush1.msra.mxu0 %v72
    %820 = vmatprep.subr.mxu0 %v69
    %821 = vmatpush1.msra.mxu0 %v68
    %822 = vmatprep.subr.mxu0 %v65
    %823 = vmatpush1.msra.mxu0 %v64
    %824 = vmatprep.subr.mxu0 %v61
    %825 = vmatpush1.msra.mxu0 %v60
    %826 = vmatprep.subr.mxu0 %v57
    %827 = vmatpush1.msra.mxu0 %v56
    %828 = vmatprep.subr.mxu0 %v181
    %829 = vmatpush2.msra.mxu0 %v180
    %830 = vmatprep.subr.mxu0 %v177
    %831 = vmatpush2.msra.mxu0 %v176
    %832 = vmatprep.subr.mxu0 %v173
    %833 = vmatpush2.msra.mxu0 %v172
    %834 = vmatprep.subr.mxu0 %v169
    %835 = vmatpush2.msra.mxu0 %v168
    %836 = vmatprep.subr.mxu0 %v165
    %837 = vmatpush2.msra.mxu0 %v164
    %838 = vmatprep.subr.mxu0 %v161
    %839 = vmatpush2.msra.mxu0 %v160
    %840 = vmatprep.subr.mxu0 %v157
    %841 = vmatpush2.msra.mxu0 %v156
    %842 = vmatprep.subr.mxu0 %v153
    %843 = vmatpush2.msra.mxu0 %v152
    %844 = vmatprep.subr.mxu0 %v149
    %845 = vmatpush2.msra.mxu0 %v148
    %846 = vmatprep.subr.mxu0 %v145
    %847 = vmatpush2.msra.mxu0 %v144
    %848 = vmatprep.subr.mxu0 %v141
    %849 = vmatpush2.msra.mxu0 %v140
    %850 = vmatprep.subr.mxu0 %v137
    %851 = vmatpush2.msra.mxu0 %v136
    %852 = vmatprep.subr.mxu0 %v133
    %853 = vmatpush2.msra.mxu0 %v132
    %854 = vmatprep.subr.mxu0 %v129
    %855 = vmatpush2.msra.mxu0 %v128
    %856 = vmatprep.subr.mxu0 %v125
    %857 = vmatpush2.msra.mxu0 %v124
    %858 = vmatprep.subr.mxu0 %v121
    %859 = vmatpush2.msra.mxu0 %v120
    %860 = vmatprep.mubr.f32.mxu0 %v485
    %861 = vmatmul.mubr.f32.gmra.mxu0 %v477
    %v862 = vpop.f32.mrf.mxu0
    %v863 = vadd.f32 %v459, %v862
    %v864 = vpop.f32.mrf.mxu0
    %v865 = vadd.f32 %v463, %v864
    %866 = vdwg.mxu0
    %867 = vmatprep.subr.mxu0 %v245
    %868 = vmatpush1.msra.mxu0 %v244
    %869 = vmatprep.subr.mxu0 %v241
    %870 = vmatpush1.msra.mxu0 %v240
    %871 = vmatprep.subr.mxu0 %v237
    %872 = vmatpush1.msra.mxu0 %v236
    %873 = vmatprep.subr.mxu0 %v233
    %874 = vmatpush1.msra.mxu0 %v232
    %875 = vmatprep.subr.mxu0 %v229
    %876 = vmatpush1.msra.mxu0 %v228
    %877 = vmatprep.subr.mxu0 %v225
    %878 = vmatpush1.msra.mxu0 %v224
    %879 = vmatprep.subr.mxu0 %v221
    %880 = vmatpush1.msra.mxu0 %v220
    %881 = vmatprep.subr.mxu0 %v217
    %882 = vmatpush1.msra.mxu0 %v216
    %883 = vmatprep.subr.mxu0 %v213
    %884 = vmatpush1.msra.mxu0 %v212
    %885 = vmatprep.subr.mxu0 %v209
    %886 = vmatpush1.msra.mxu0 %v208
    %887 = vmatprep.subr.mxu0 %v205
    %888 = vmatpush1.msra.mxu0 %v204
    %889 = vmatprep.subr.mxu0 %v201
    %890 = vmatpush1.msra.mxu0 %v200
    %891 = vmatprep.subr.mxu0 %v197
    %892 = vmatpush1.msra.mxu0 %v196
    %893 = vmatprep.subr.mxu0 %v193
    %894 = vmatpush1.msra.mxu0 %v192
    %895 = vmatprep.subr.mxu0 %v189
    %896 = vmatpush1.msra.mxu0 %v188
    %897 = vmatprep.subr.mxu0 %v185
    %898 = vmatpush1.msra.mxu0 %v184
    %899 = vmatprep.subr.mxu0 %v309
    %900 = vmatpush2.msra.mxu0 %v308
    %901 = vmatprep.subr.mxu0 %v305
    %902 = vmatpush2.msra.mxu0 %v304
    %903 = vmatprep.subr.mxu0 %v301
    %904 = vmatpush2.msra.mxu0 %v300
    %905 = vmatprep.subr.mxu0 %v297
    %906 = vmatpush2.msra.mxu0 %v296
    %907 = vmatprep.subr.mxu0 %v293
    %908 = vmatpush2.msra.mxu0 %v292
    %909 = vmatprep.subr.mxu0 %v289
    %910 = vmatpush2.msra.mxu0 %v288
    %911 = vmatprep.subr.mxu0 %v285
    %912 = vmatpush2.msra.mxu0 %v284
    %913 = vmatprep.subr.mxu0 %v281
    %914 = vmatpush2.msra.mxu0 %v280
    %915 = vmatprep.subr.mxu0 %v277
    %916 = vmatpush2.msra.mxu0 %v276
    %917 = vmatprep.subr.mxu0 %v273
    %918 = vmatpush2.msra.mxu0 %v272
    %919 = vmatprep.subr.mxu0 %v269
    %920 = vmatpush2.msra.mxu0 %v268
    %921 = vmatprep.subr.mxu0 %v265
    %922 = vmatpush2.msra.mxu0 %v264
    %923 = vmatprep.subr.mxu0 %v261
    %924 = vmatpush2.msra.mxu0 %v260
    %925 = vmatprep.subr.mxu0 %v257
    %926 = vmatpush2.msra.mxu0 %v256
    %927 = vmatprep.subr.mxu0 %v253
    %928 = vmatpush2.msra.mxu0 %v252
    %929 = vmatprep.subr.mxu0 %v249
    %930 = vmatpush2.msra.mxu0 %v248
    %931 = vmatprep.mubr.f32.mxu0 %v486
    %932 = vmatmul.mubr.f32.gmra.mxu0 %v484
    %v933 = vpop.f32.mrf.mxu0
    %v934 = vadd.f32 %v863, %v933
    %v935 = vpop.f32.mrf.mxu0
    %v936 = vadd.f32 %v865, %v935
    %937 = vdwg.mxu0
    %938 = vmatprep.subr.mxu0 %v373
    %939 = vmatpush1.msra.mxu0 %v372
    %940 = vmatprep.subr.mxu0 %v369
    %941 = vmatpush1.msra.mxu0 %v368
    %942 = vmatprep.subr.mxu0 %v365
    %943 = vmatpush1.msra.mxu0 %v364
    %944 = vmatprep.subr.mxu0 %v361
    %945 = vmatpush1.msra.mxu0 %v360
    %946 = vmatprep.subr.mxu0 %v357
    %947 = vmatpush1.msra.mxu0 %v356
    %948 = vmatprep.subr.mxu0 %v353
    %949 = vmatpush1.msra.mxu0 %v352
    %950 = vmatprep.subr.mxu0 %v349
    %951 = vmatpush1.msra.mxu0 %v348
    %952 = vmatprep.subr.mxu0 %v345
    %953 = vmatpush1.msra.mxu0 %v344
    %954 = vmatprep.subr.mxu0 %v341
    %955 = vmatpush1.msra.mxu0 %v340
    %956 = vmatprep.subr.mxu0 %v337
    %957 = vmatpush1.msra.mxu0 %v336
    %958 = vmatprep.subr.mxu0 %v333
    %959 = vmatpush1.msra.mxu0 %v332
    %960 = vmatprep.subr.mxu0 %v329
    %961 = vmatpush1.msra.mxu0 %v328
    %962 = vmatprep.subr.mxu0 %v325
    %963 = vmatpush1.msra.mxu0 %v324
    %964 = vmatprep.subr.mxu0 %v321
    %965 = vmatpush1.msra.mxu0 %v320
    %966 = vmatprep.subr.mxu0 %v317
    %967 = vmatpush1.msra.mxu0 %v316
    %968 = vmatprep.subr.mxu0 %v313
    %969 = vmatpush1.msra.mxu0 %v312
    %970 = vmatprep.subr.mxu0 %v437
    %971 = vmatpush2.msra.mxu0 %v436
    %972 = vmatprep.subr.mxu0 %v433
    %973 = vmatpush2.msra.mxu0 %v432
    %974 = vmatprep.subr.mxu0 %v429
    %975 = vmatpush2.msra.mxu0 %v428
    %976 = vmatprep.subr.mxu0 %v425
    %977 = vmatpush2.msra.mxu0 %v424
    %978 = vmatprep.subr.mxu0 %v421
    %979 = vmatpush2.msra.mxu0 %v420
    %980 = vmatprep.subr.mxu0 %v417
    %981 = vmatpush2.msra.mxu0 %v416
    %982 = vmatprep.subr.mxu0 %v413
    %983 = vmatpush2.msra.mxu0 %v412
    %984 = vmatprep.subr.mxu0 %v409
    %985 = vmatpush2.msra.mxu0 %v408
    %986 = vmatprep.subr.mxu0 %v405
    %987 = vmatpush2.msra.mxu0 %v404
    %988 = vmatprep.subr.mxu0 %v401
    %989 = vmatpush2.msra.mxu0 %v400
    %990 = vmatprep.subr.mxu0 %v397
    %991 = vmatpush2.msra.mxu0 %v396
    %992 = vmatprep.subr.mxu0 %v393
    %993 = vmatpush2.msra.mxu0 %v392
    %994 = vmatprep.subr.mxu0 %v389
    %995 = vmatpush2.msra.mxu0 %v388
    %996 = vmatprep.subr.mxu0 %v385
    %997 = vmatpush2.msra.mxu0 %v384
    %998 = vmatprep.subr.mxu0 %v381
    %999 = vmatpush2.msra.mxu0 %v380
    %1000 = vmatprep.subr.mxu0 %v377
    %1001 = vmatpush2.msra.mxu0 %v376
    %1002 = vmatprep.mubr.f32.mxu0 %v502
    %1003 = vmatmul.mubr.f32.gmra.mxu0 %v494
    %v1004 = vpop.f32.mrf.mxu0
    %v1005 = vadd.f32 %v934, %v1004
    %v1006 = vpop.f32.mrf.mxu0
    %v1007 = vadd.f32 %v936, %v1006
    %1008 = vdwg.mxu0
    %1009 = vmatprep.subr.mxu0 0.0
    %1010 = vmatpush1.msra.mxu0 0.0
    %1011 = vmatprep.subr.mxu0 0.0
    %1012 = vmatpush1.msra.mxu0 0.0
    %1013 = vmatprep.subr.mxu0 0.0
    %1014 = vmatpush1.msra.mxu0 0.0
    %1015 = vmatprep.subr.mxu0 0.0
    %1016 = vmatpush1.msra.mxu0 0.0
    %1017 = vmatprep.subr.mxu0 0.0
    %1018 = vmatpush1.msra.mxu0 0.0
    %1019 = vmatprep.subr.mxu0 0.0
    %1020 = vmatpush1.msra.mxu0 0.0
    %1021 = vmatprep.subr.mxu0 0.0
    %1022 = vmatpush1.msra.mxu0 0.0
    %1023 = vmatprep.subr.mxu0 0.0
    %1024 = vmatpush1.msra.mxu0 0.0
    %1025 = vmatprep.subr.mxu0 0.0
    %1026 = vmatpush1.msra.mxu0 0.0
    %1027 = vmatprep.subr.mxu0 0.0
    %1028 = vmatpush1.msra.mxu0 0.0
    %1029 = vmatprep.subr.mxu0 0.0
    %1030 = vmatpush1.msra.mxu0 0.0
    %1031 = vmatprep.subr.mxu0 0.0
    %1032 = vmatpush1.msra.mxu0 0.0
    %1033 = vmatprep.subr.mxu0 0.0
    %1034 = vmatpush1.msra.mxu0 0.0
    %1035 = vmatprep.subr.mxu0 0.0
    %1036 = vmatpush1.msra.mxu0 0.0
    %1037 = vmatprep.subr.mxu0 %v445
    %1038 = vmatpush1.msra.mxu0 %v444
    %1039 = vmatprep.subr.mxu0 %v441
    %1040 = vmatpush1.msra.mxu0 %v440
    %1041 = vmatprep.subr.mxu0 0.0
    %1042 = vmatpush2.msra.mxu0 0.0
    %1043 = vmatprep.subr.mxu0 0.0
    %1044 = vmatpush2.msra.mxu0 0.0
    %1045 = vmatprep.subr.mxu0 0.0
    %1046 = vmatpush2.msra.mxu0 0.0
    %1047 = vmatprep.subr.mxu0 0.0
    %1048 = vmatpush2.msra.mxu0 0.0
    %1049 = vmatprep.subr.mxu0 0.0
    %1050 = vmatpush2.msra.mxu0 0.0
    %1051 = vmatprep.subr.mxu0 0.0
    %1052 = vmatpush2.msra.mxu0 0.0
    %1053 = vmatprep.subr.mxu0 0.0
    %1054 = vmatpush2.msra.mxu0 0.0
    %1055 = vmatprep.subr.mxu0 0.0
    %1056 = vmatpush2.msra.mxu0 0.0
    %1057 = vmatprep.subr.mxu0 0.0
    %1058 = vmatpush2.msra.mxu0 0.0
    %1059 = vmatprep.subr.mxu0 0.0
    %1060 = vmatpush2.msra.mxu0 0.0
    %1061 = vmatprep.subr.mxu0 0.0
    %1062 = vmatpush2.msra.mxu0 0.0
    %1063 = vmatprep.subr.mxu0 0.0
    %1064 = vmatpush2.msra.mxu0 0.0
    %1065 = vmatprep.subr.mxu0 0.0
    %1066 = vmatpush2.msra.mxu0 0.0
    %1067 = vmatprep.subr.mxu0 0.0
    %1068 = vmatpush2.msra.mxu0 0.0
    %1069 = vmatprep.subr.mxu0 0.0
    %1070 = vmatpush2.msra.mxu0 0.0
    %1071 = vmatprep.subr.mxu0 0.0
    %1072 = vmatpush2.msra.mxu0 0.0
    %1073 = vmatprep.mubr.f32.mxu0 0.0
    %1074 = vmatmul.mubr.f32.gmra.mxu0 %v510
    %v1075 = vpop.f32.mrf.mxu0
    %v1076 = vadd.f32 %v1005, %v1075
    %v1077 = vpop.f32.mrf.mxu0
    %v1078 = vadd.f32 %v1007, %v1077
    %1079 = vdwg.mxu0
    %v1084 = vcombine.low %v792, %v794
    %v1085 = vcombine.low %v1076, %v1078
    %v1087 = vunpack.c.l.s4 1983009808
    %v1088 = vunpack.c.0.s8 %v1087
    %v1089 = vlaneseq
    %v1090 = vshrl.u32 %v1089, 7
    %v1091 = vsub.s32 %v1088, %v1090
    %v1092 = vrot.slane %v1084, %v1091
    %v1094 = vunpack.c.l.s4 1983009808
    %v1095 = vunpack.c.0.s8 %v1094
    %v1096 = vlaneseq
    %v1097 = vshrl.u32 %v1096, 7
    %v1098 = vsub.s32 %v1095, %v1097
    %v1099 = vrot.slane %v1085, %v1098
    %v1100 = vcombine.low %v1092, %v1099
    %1102 = vst [vmem:[#allocation8] sm:$0xff] %v1100
    // Predicated region
    $region26: #{tpu_custom_call.1} parent=1 // pred_check
      _
    $region27: #{tpu_custom_call.1} parent=1 // pred_check_branch
      %1104 = sbr.rel (0) target = $region29
    $region28: #{tpu_custom_call.1} parent=1 // pred_region
      %s1106 = ssub.s32 128, 128
      %1107 = vsyncadd [#allocation4], %s1106
      %s1109 = sshll.u32 [#allocation8], 4
      %s1110 = int_to_ptr.vmem [resolvable:$true] %s1109
      %1112 = dma.vmem_to_hbm [thread:$0]  %s1110, 128, %s3, [#allocation4]
    $region29: #{tpu_custom_call.1} parent=1 // pred_fallthru
      _
    // Predicated region
    $region30: #{tpu_custom_call.1} parent=1 // pred_check
      _
    $region31: #{tpu_custom_call.1} parent=1 // pred_check_branch
      %1114 = sbr.rel (0) target = $region33
    $region32: #{tpu_custom_call.1} parent=1 // pred_region
      %1115 = dma.done [#allocation4], 128
    $region33: #{tpu_custom_call.1} parent=1 // pred_fallthru
      _
    %1116 = vsyncpa [#allocation3], 1
    %1117 = vsyncpa [#allocation6], 1
    %1118 = vsyncpa [#allocation4], 1

</llo_original>
